<compile_context>
chip_gen: v7x
topology: tpu7x:2x2x1
jax: 0.10.0
libtpu: 0.0.40
codegen_flags: <defaults>
</compile_context>

<pallas_src>
import functools
import math

import jax
import jax.numpy as jnp
from jax import lax
from jax.experimental import pallas as pl
from jax.experimental.pallas import tpu as pltpu

_LANE = 128


def _device_kind():
    try:
        return jax.devices()[0].device_kind.lower()
    except Exception:
        return ""


def _vmem_budgets():
    """(vmem_limit_bytes, working-set budget) for the local TPU generation."""
    kind = _device_kind()
    if "v7" in kind:
        # v7x: 64 MiB physical VMEM per TC -> leave headroom for Mosaic scratch.
        return 28 << 20, 16 << 20
    # v5e / v6e: 128 MiB physical VMEM; raise the 16/32 MiB scoped default.
    return 64 << 20, 32 << 20


def _sublane_multiple(dtype):
    # Sub-32-bit dtypes pack along sublanes: bf16 -> 16 rows, int8/fp8 -> 32.
    return max(8, 32 // jnp.dtype(dtype).itemsize)


def _pick_block_rows(n_rows, c_pad, in_dtype, out_dtype, ws_budget):
    """Largest sublane-aligned row tile whose working set fits the VMEM budget."""
    sub = _sublane_multiple(in_dtype)
    if n_rows <= sub:
        return n_rows  # full leading dim; satisfies the (8,128) rule directly
    in_b = jnp.dtype(in_dtype).itemsize
    out_b = jnp.dtype(out_dtype).itemsize
    # Per-row footprint: double-buffered input + output tiles plus ~3 f32
    # intermediates (upcast x, centered x, affine result).
    bytes_per_row = c_pad * (2 * in_b + 2 * out_b + 3 * 4)
    rows = max(sub, ws_budget // max(bytes_per_row, 1))
    rows = min(rows, 1024, n_rows)
    rows = max(sub, (rows // sub) * sub)
    # Guarantee >= 2 grid steps so "parallel" can split rows across the two
    # v7x TensorCores (neutral on single-TC v5e/v6e).
    if rows >= n_rows:
        rows = max(sub, (((n_rows + 1) // 2) // sub) * sub)
    return rows


def _layer_norm_kernel(*refs, eps, c_valid, c_padded, affine_dtype, has_bias):
    if has_bias:
        x_ref, w_ref, b_ref, o_ref = refs
    else:
        x_ref, w_ref, o_ref = refs
        b_ref = None

    x = x_ref[...].astype(jnp.float32)
    inv_c = jnp.float32(1.0 / c_valid)
    mean = jnp.sum(x, axis=-1, keepdims=True) * inv_c
    xc = x - mean
    if c_padded:
        # Zero-padded feature lanes must not contribute to the variance.
        lane = lax.broadcasted_iota(jnp.int32, (1, x.shape[-1]), 1)
        xc = jnp.where(lane < c_valid, xc, 0.0)
    var = jnp.sum(xc * xc, axis=-1, keepdims=True) * inv_c
    inv = lax.rsqrt(var + eps)  # EUP slot -> effectively free

    if affine_dtype == jnp.float32:
        y = xc * inv * w_ref[...].astype(jnp.float32)
        if b_ref is not None:
            y = y + b_ref[...].astype(jnp.float32)
    else:
        # bf16 affine (v6e/v7x only): stats stayed in f32, normalize in f32,
        # then scale/shift at native bf16 width to halve vreg/VMEM pressure.
        y = (xc * inv).astype(affine_dtype) * w_ref[...].astype(affine_dtype)
        if b_ref is not None:
            y = y + b_ref[...].astype(affine_dtype)
    o_ref[...] = y.astype(o_ref.dtype)


def layer_norm(x, weight, bias=None, eps=1e-5):
    """Pallas TPU LayerNorm over the last dim (F.layer_norm semantics)."""
    orig_shape = x.shape
    c = orig_shape[-1]
    n_rows = math.prod(orig_shape[:-1])

    # Lane-dense output: pad the feature dim to a multiple of 128 (masked
    # in-kernel, sliced off afterwards). Production C (multiples of 128) skip this.
    c_pad = ((c + _LANE - 1) // _LANE) * _LANE
    padded = c_pad != c

    x2 = x.reshape(n_rows, c)
    w2 = weight.reshape(1, c)
    b2 = bias.reshape(1, c) if bias is not None else None
    if padded:
        pw = ((0, 0), (0, c_pad - c))
        x2 = jnp.pad(x2, pw)
        w2 = jnp.pad(w2, pw)
        if b2 is not None:
            b2 = jnp.pad(b2, pw)

    vmem_limit, ws_budget = _vmem_budgets()
    block_rows = _pick_block_rows(n_rows, c_pad, x.dtype, x.dtype, ws_budget)
    grid = (pl.cdiv(n_rows, block_rows),)

    kind = _device_kind()
    affine_dtype = (jnp.bfloat16
                    if (x.dtype == jnp.bfloat16 and "v5" not in kind)
                    else jnp.float32)

    kernel = functools.partial(
        _layer_norm_kernel, eps=eps, c_valid=c, c_padded=padded,
        affine_dtype=affine_dtype, has_bias=bias is not None)

    row_spec = pl.BlockSpec((block_rows, c_pad), lambda i: (i, 0))
    vec_spec = pl.BlockSpec((1, c_pad), lambda i: (0, 0))
    in_specs = [row_spec, vec_spec] + ([vec_spec] if bias is not None else [])
    args = (x2, w2) + ((b2,) if bias is not None else ())

    out = pl.pallas_call(
        kernel,
        out_shape=jax.ShapeDtypeStruct((n_rows, c_pad), x.dtype),
        grid_spec=pltpu.PrefetchScalarGridSpec(
            num_scalar_prefetch=0,
            grid=grid,
            in_specs=in_specs,
            out_specs=row_spec,
        ),
        compiler_params=pltpu.CompilerParams(
            dimension_semantics=("parallel",),
            vmem_limit_bytes=vmem_limit,
        ),
    )(*args)

    if padded:
        out = out[:, :c]
    return out.reshape(orig_shape)


def layer_norm_reference(x, weight, bias=None, eps=1e-5):
    """Pure-JAX reference mirroring F.layer_norm(input, weight.shape, weight, bias, eps)."""
    x32 = x.astype(jnp.float32)
    mean = jnp.mean(x32, axis=-1, keepdims=True)
    var = jnp.mean(jnp.square(x32 - mean), axis=-1, keepdims=True)
    y = (x32 - mean) / jnp.sqrt(var + eps)
    y = y * weight.astype(jnp.float32)
    if bias is not None:
        y = y + bias.astype(jnp.float32)
    return y.astype(x.dtype)


if __name__ == "__main__":
    # Small shapes consistent with the module's use in a GPT-style model:
    # batch=2, seq=8, n_embd=32.
    B, T, C = 2, 8, 32
    key = jax.random.PRNGKey(0)
    kx, kw, kb = jax.random.split(key, 3)

    x = jax.random.normal(kx, (B, T, C), dtype=jnp.float32)
    # Module initializes weight=ones, bias=zeros; perturb deterministically so
    # the affine transform is actually exercised.
    weight = jnp.ones((C,), jnp.float32) + 0.1 * jax.random.normal(kw, (C,), jnp.float32)
    bias = jnp.zeros((C,), jnp.float32) + 0.1 * jax.random.normal(kb, (C,), jnp.float32)

    out = jax.block_until_ready(layer_norm(x, weight, bias))
    ref = layer_norm_reference(x, weight, bias)
    assert out.shape == (B, T, C)
    assert jnp.allclose(out, ref, atol=1e-5, rtol=1e-5), "bias path mismatch"

    # bias=None path (LayerNorm(ndim, bias=False))
    out_nb = jax.block_until_ready(layer_norm(x, weight, None))
    ref_nb = layer_norm_reference(x, weight, None)
    assert jnp.allclose(out_nb, ref_nb, atol=1e-5, rtol=1e-5), "no-bias path mismatch"

    print("KERNEL_OK")
</pallas_src>

<mosaic_0001>
module attributes {stable_mosaic.version = 11 : i64} {
  func.func @_layer_norm_kernel(%arg0: i32, %arg1: memref<8x128xf32, #tpu.memory_space<vmem>>, %arg2: memref<1x128xf32, #tpu.memory_space<vmem>>, %arg3: memref<1x128xf32, #tpu.memory_space<vmem>>, %arg4: memref<8x128xf32, #tpu.memory_space<vmem>>) attributes {dimension_semantics = [#tpu.dimension_semantics<parallel>], iteration_bounds = array<i64: 2>, scalar_prefetch = 0 : i64, scratch_operands = 0 : i64, tpu.core_type = #tpu.core_type<tc>, window_params = [{transform_indices = @transform_0, window_bounds = array<i64: 8, 128>}, {pipeline_mode = #tpu.pipeline_mode<synchronous>, transform_indices = @transform_1, window_bounds = array<i64: 1, 128>}, {pipeline_mode = #tpu.pipeline_mode<synchronous>, transform_indices = @transform_2, window_bounds = array<i64: 1, 128>}, {transform_indices = @transform_3, window_bounds = array<i64: 8, 128>}]} {
    %c0 = arith.constant 0 : index
    %c0_0 = arith.constant 0 : index
    %0 = vector.load %arg1[%c0, %c0_0] : memref<8x128xf32, #tpu.memory_space<vmem>>, vector<8x128xf32>
    %cst = arith.constant dense<0.000000e+00> : vector<8xf32>
    %1 = vector.multi_reduction <add>, %0, %cst [1] : vector<8x128xf32> to vector<8xf32>
    %2 = vector.shape_cast %1 : vector<8xf32> to vector<8x1xf32>
    %cst_1 = arith.constant 3.125000e-02 : f32
    %3 = vector.broadcast %cst_1 : f32 to vector<8x1xf32>
    %4 = arith.mulf %2, %3 : vector<8x1xf32>
    %5 = vector.broadcast %4 : vector<8x1xf32> to vector<8x128xf32>
    %6 = arith.subf %0, %5 : vector<8x128xf32>
    %7 = tpu.iota {dimensions = array<i32: 1>} : vector<1x128xi32>
    %c32_i32 = arith.constant 32 : i32
    %8 = vector.broadcast %c32_i32 : i32 to vector<1x128xi32>
    %9 = arith.cmpi slt, %7, %8 : vector<1x128xi32>
    %cst_2 = arith.constant 0.000000e+00 : f32
    %10 = vector.shape_cast %9 : vector<1x128xi1> to vector<1x128xi1>
    %11 = vector.broadcast %10 : vector<1x128xi1> to vector<8x128xi1>
    %12 = vector.broadcast %cst_2 : f32 to vector<8x128xf32>
    %13 = arith.select %11, %6, %12 : vector<8x128xi1>, vector<8x128xf32>
    %14 = arith.mulf %13, %13 : vector<8x128xf32>
    %cst_3 = arith.constant dense<0.000000e+00> : vector<8xf32>
    %15 = vector.multi_reduction <add>, %14, %cst_3 [1] : vector<8x128xf32> to vector<8xf32>
    %16 = vector.shape_cast %15 : vector<8xf32> to vector<8x1xf32>
    %cst_4 = arith.constant 3.125000e-02 : f32
    %17 = vector.broadcast %cst_4 : f32 to vector<8x1xf32>
    %18 = arith.mulf %16, %17 : vector<8x1xf32>
    %cst_5 = arith.constant 9.99999974E-6 : f32
    %19 = vector.broadcast %cst_5 : f32 to vector<8x1xf32>
    %20 = arith.addf %18, %19 : vector<8x1xf32>
    %21 = math.rsqrt %20 : vector<8x1xf32>
    %22 = vector.broadcast %21 : vector<8x1xf32> to vector<8x128xf32>
    %23 = arith.mulf %13, %22 : vector<8x128xf32>
    %c0_6 = arith.constant 0 : index
    %c0_7 = arith.constant 0 : index
    %24 = vector.load %arg2[%c0_6, %c0_7] : memref<1x128xf32, #tpu.memory_space<vmem>>, vector<1x128xf32>
    %25 = vector.broadcast %24 : vector<1x128xf32> to vector<8x128xf32>
    %26 = arith.mulf %23, %25 : vector<8x128xf32>
    %c0_8 = arith.constant 0 : index
    %c0_9 = arith.constant 0 : index
    %27 = vector.load %arg3[%c0_8, %c0_9] : memref<1x128xf32, #tpu.memory_space<vmem>>, vector<1x128xf32>
    %28 = vector.broadcast %27 : vector<1x128xf32> to vector<8x128xf32>
    %29 = arith.addf %26, %28 : vector<8x128xf32>
    %c0_10 = arith.constant 0 : index
    %c0_11 = arith.constant 0 : index
    %30 = vector.load %arg4[%c0_10, %c0_11] : memref<8x128xf32, #tpu.memory_space<vmem>>, vector<8x128xf32>
    tpu.vector_store %arg4[%c0_10, %c0_11], %29 {strides = array<i32>} : memref<8x128xf32, #tpu.memory_space<vmem>>, vector<8x128xf32>,
    return
  }
  func.func @transform_0(%arg0: i32) -> (i32, i32) {
    %c0_i32 = arith.constant 0 : i32
    %c0_i32_0 = arith.constant 0 : i32
    return %arg0, %c0_i32 : i32, i32
  }
  func.func @transform_1(%arg0: i32) -> (i32, i32) {
    %c0_i32 = arith.constant 0 : i32
    %c0_i32_0 = arith.constant 0 : i32
    %c0_i32_1 = arith.constant 0 : i32
    return %c0_i32, %c0_i32_0 : i32, i32
  }
  func.func @transform_2(%arg0: i32) -> (i32, i32) {
    %c0_i32 = arith.constant 0 : i32
    %c0_i32_0 = arith.constant 0 : i32
    %c0_i32_1 = arith.constant 0 : i32
    return %c0_i32, %c0_i32_0 : i32, i32
  }
  func.func @transform_3(%arg0: i32) -> (i32, i32) {
    %c0_i32 = arith.constant 0 : i32
    %c0_i32_0 = arith.constant 0 : i32
    return %arg0, %c0_i32 : i32, i32
  }
}

</mosaic_0001>

<llo_original>
// kernel: tpu_custom_call.1
$region0: #{tpu_custom_call.1}
  #allocation0 [shape = 'u32[]', space=smem, size = 0x4, offset = 0x4, fixed_abs, tag = 'smem constant byte address 0x4 - core index']
  #allocation1 [shape = 'u32[144,128]{1,0:T(1,128)}', space=vmem, size = 0x12000, scoped, tag = 'internal scratch']
  %s0 = inlined_call_operand.hbm [shape: f32[16,128], index: 0, kind: input, shape index: {}]
  %s1 = inlined_call_operand.hbm [shape: f32[1,128], index: 1, kind: input, shape index: {}]
  %s2 = inlined_call_operand.hbm [shape: f32[1,128], index: 2, kind: input, shape index: {}]
  %s3 = inlined_call_operand.hbm [shape: f32[16,128], index: 3, kind: output, shape index: {}]
  %s4 = sld [smem:[#allocation0]]
  $region57: #{tpu_custom_call.1} parent=0
    _
  %s6 = ssub.s32 1, %s4
  %s7 = scalar_select 0, %s6, %s4
  $region1: #{tpu_custom_call.1} parent=0
    #allocation2 [shape = 'u8[8192]{0}', space=vmem, size = 0x2000, scoped, tag = 'input window, operand 0']
    #allocation3 [shape = 's32[2]{0}', space=sflag, size = 0x8, scoped, tag = 'scoped memory for tpu_custom_call.1']
    #allocation4 [shape = 's32[2]{0}', space=sflag, size = 0x8, scoped, tag = 'scoped memory for tpu_custom_call.1']
    #allocation5 [shape = 'u8[512]{0}', space=vmem, size = 0x400, scoped, tag = 'input window, operand 1, single buffered']
    #allocation6 [shape = 's32[1]{0}', space=sflag, size = 0x4, scoped, tag = 'scoped memory for tpu_custom_call.1']
    #allocation7 [shape = 'u8[512]{0}', space=vmem, size = 0x400, scoped, tag = 'input window, operand 2, single buffered']
    #allocation8 [shape = 'u8[8192]{0}', space=vmem, size = 0x2000, scoped, tag = 'output window, operand 0']
    %8 = vsyncpa [#allocation3], 0
    %s9 = scalar_lea.sflag [#allocation3], 1
    %10 = vsyncpa %s9, 0
    %11 = vsyncpa [#allocation6], 0
    %12 = vsyncpa [#allocation4], 0
    %s13 = scalar_lea.sflag [#allocation4], 1
    %14 = vsyncpa %s13, 0
    loop: start=0, step=1, limit=4
    $region2: #{tpu_custom_call.1} parent=1 // loop_pre_header
      _
    $region3: #{tpu_custom_call.1} parent=1 // loop_header
      %s16 = sphi 0, %s20
      %p17 = scmp.ge.s32.totalorder %s16, 4
      %s26 = sphi 0, %s28
      %s29 = sphi 0, %s26
      %s30 = sphi 0, %s29
      %s46 = sphi 0, %s30
      %s50 = sphi 0, %s50
      %s52 = sphi 0, %s50
      %s53 = sphi 0, %s52
      %s67 = sphi 0, %s53
      %s71 = sphi 0, %s71
      %s73 = sphi 0, %s71
      %s74 = sphi 0, %s73
      %s88 = sphi 0, %s74
      %s94 = sphi 0, %s96
      %s97 = sphi 0, %s94
      %s98 = sphi 0, %s97
      %s114 = sphi 0, %s98
    $region4: #{tpu_custom_call.1} parent=1 // loop_header_branch
      %19 = sbr.rel (%p17) target = $region8
    $region5: #{tpu_custom_call.1} parent=1 // loop_body
      %s21 = ssub.s32 %s16, 1
      %s22 = ssub.s32 %s16, 2
      %s23 = sadd.s32 %s16, 1
      %s24 = ssub.s32 %s16, %s23
      %p25 = scmp.eq.s32.totalorder %s24, 0
      %s27 = sadd.s32 %s26, 1
      %s28 = scalar_select %p25, %s26, %s27
      %p31 = pneg %p25
      %p32 = scmp.eq.s32.totalorder %s16, 1
      %p33 = por %p31, %p32
      %p34 = scmp.ne.s32.totalorder %s26, %s29
      %p35 = scmp.eq.s32.totalorder %s16, 0
      %p36 = por %p34, %p35
      %p37 = scmp.ne.s32.totalorder %s26, %s29
      %p38 = scmp.eq.s32.totalorder %s21, 1
      %p39 = por %p37, %p38
      %p40 = scmp.ne.s32.totalorder %s29, %s30
      %p41 = scmp.eq.s32.totalorder %s21, 0
      %p42 = por %p40, %p41
      %p43 = scmp.ne.s32.totalorder %s29, %s30
      %p44 = scmp.eq.s32.totalorder %s22, 1
      %p45 = por %p43, %p44
      %p47 = scmp.ne.s32.totalorder %s30, %s46
      %p48 = scmp.eq.s32.totalorder %s22, 0
      %p49 = por %p47, %p48
      %s51 = sadd.s32 %s50, 1
      %p54 = scmp.eq.s32.totalorder %s16, 1
      %p55 = scmp.ne.s32.totalorder %s50, %s52
      %p56 = scmp.eq.s32.totalorder %s16, 0
      %p57 = por %p55, %p56
      %p58 = scmp.ne.s32.totalorder %s50, %s52
      %p59 = scmp.eq.s32.totalorder %s21, 1
      %p60 = por %p58, %p59
      %p61 = scmp.ne.s32.totalorder %s52, %s53
      %p62 = scmp.eq.s32.totalorder %s21, 0
      %p63 = por %p61, %p62
      %p64 = scmp.ne.s32.totalorder %s52, %s53
      %p65 = scmp.eq.s32.totalorder %s22, 1
      %p66 = por %p64, %p65
      %p68 = scmp.ne.s32.totalorder %s53, %s67
      %p69 = scmp.eq.s32.totalorder %s22, 0
      %p70 = por %p68, %p69
      %s72 = sadd.s32 %s71, 1
      %p75 = scmp.eq.s32.totalorder %s16, 1
      %p76 = scmp.ne.s32.totalorder %s71, %s73
      %p77 = scmp.eq.s32.totalorder %s16, 0
      %p78 = por %p76, %p77
      %p79 = scmp.ne.s32.totalorder %s71, %s73
      %p80 = scmp.eq.s32.totalorder %s21, 1
      %p81 = por %p79, %p80
      %p82 = scmp.ne.s32.totalorder %s73, %s74
      %p83 = scmp.eq.s32.totalorder %s21, 0
      %p84 = por %p82, %p83
      %p85 = scmp.ne.s32.totalorder %s73, %s74
      %p86 = scmp.eq.s32.totalorder %s22, 1
      %p87 = por %p85, %p86
      %p89 = scmp.ne.s32.totalorder %s74, %s88
      %p90 = scmp.eq.s32.totalorder %s22, 0
      %p91 = por %p89, %p90
      %s92 = ssub.s32 %s16, %s23
      %p93 = scmp.eq.s32.totalorder %s92, 0
      %s95 = sadd.s32 %s94, 1
      %s96 = scalar_select %p93, %s94, %s95
      %p99 = pneg %p93
      %p100 = scmp.eq.s32.totalorder %s16, 1
      %p101 = por %p99, %p100
      %p102 = scmp.ne.s32.totalorder %s94, %s97
      %p103 = scmp.eq.s32.totalorder %s16, 0
      %p104 = por %p102, %p103
      %p105 = scmp.ne.s32.totalorder %s94, %s97
      %p106 = scmp.eq.s32.totalorder %s21, 1
      %p107 = por %p105, %p106
      %p108 = scmp.ne.s32.totalorder %s97, %s98
      %p109 = scmp.eq.s32.totalorder %s21, 0
      %p110 = por %p108, %p109
      %p111 = scmp.ne.s32.totalorder %s97, %s98
      %p112 = scmp.eq.s32.totalorder %s22, 1
      %p113 = por %p111, %p112
      %p115 = scmp.ne.s32.totalorder %s98, %s114
      %p116 = scmp.eq.s32.totalorder %s22, 0
      %p117 = por %p115, %p116
      %p118 = scmp.le.s32.totalorder 1, %s16
      %p119 = scmp.lt.s32.totalorder %s16, 3
      %p120 = pnand %p118, %p119
      %p121 = pneg %p120
      // Predicated region
      $region9: #{tpu_custom_call.1} parent=5 // pred_check
        _
      $region10: #{tpu_custom_call.1} parent=5 // pred_check_branch
        %123 = sbr.rel (%p120) target = $region12
      $region11: #{tpu_custom_call.1} parent=5 // pred_region
        %s124 = ssub.s32 %s16, 1
        // Predicated region
        $region13: #{tpu_custom_call.1} parent=11 // pred_check
          %p125 = pneg %p63
        $region14: #{tpu_custom_call.1} parent=11 // pred_check_branch
          %127 = sbr.rel (%p125) target = $region16
        $region15: #{tpu_custom_call.1} parent=11 // pred_region
          %s129 = ssub.s32 16, 16
          %130 = vsyncadd [#allocation6], %s129
          %s132 = sshll.u32 [#allocation5], 4
          %s133 = int_to_ptr.vmem [resolvable:$true] %s132
          %135 = dma.hbm_to_vmem [thread:$0]  %s1, 16, %s133, [#allocation6]
        $region16: #{tpu_custom_call.1} parent=11 // pred_fallthru
          _
        // Predicated region
        $region17: #{tpu_custom_call.1} parent=11 // pred_check
          %p136 = pneg %p84
        $region18: #{tpu_custom_call.1} parent=11 // pred_check_branch
          %138 = sbr.rel (%p136) target = $region20
        $region19: #{tpu_custom_call.1} parent=11 // pred_region
          %s140 = ssub.s32 16, 16
          %141 = vsyncadd [#allocation6], %s140
          %s143 = sshll.u32 [#allocation7], 4
          %s144 = int_to_ptr.vmem [resolvable:$true] %s143
          %146 = dma.hbm_to_vmem [thread:$0]  %s2, 16, %s144, [#allocation6]
        $region20: #{tpu_custom_call.1} parent=11 // pred_fallthru
          _
      $region12: #{tpu_custom_call.1} parent=5 // pred_fallthru
        _
      %p147 = scmp.lt.s32.totalorder %s16, 2
      // Predicated region
      $region21: #{tpu_custom_call.1} parent=5 // pred_check
        %p148 = pneg %p147
      $region22: #{tpu_custom_call.1} parent=5 // pred_check_branch
        %150 = sbr.rel (%p148) target = $region24
      $region23: #{tpu_custom_call.1} parent=5 // pred_region
        // Predicated region
        $region25: #{tpu_custom_call.1} parent=23 // pred_check
          %p151 = pneg %p36
        $region26: #{tpu_custom_call.1} parent=23 // pred_check_branch
          %153 = sbr.rel (%p151) target = $region28
        $region27: #{tpu_custom_call.1} parent=23 // pred_region
          %s154 = sand.u32 %s26, 1
          %s155 = scalar_lea.sflag [#allocation3], %s154
          %s156 = sand.u32 %s26, 1
          %s157 = smul.addr %s156, 8
          %s158 = scalar_lea.vmem [#allocation2], %s157
          %s160 = ssub.s32 128, 128
          %161 = vsyncadd %s155, %s160
          %s162 = smul.addr %s16, 128
          %s163 = scalar_lea.hbm %s0, %s162
          %s165 = sshll.u32 %s158, 4
          %s166 = int_to_ptr.vmem [resolvable:$true] %s165
          %168 = dma.hbm_to_vmem [thread:$0]  %s163, 128, %s166, %s155
        $region28: #{tpu_custom_call.1} parent=23 // pred_fallthru
          _
      $region24: #{tpu_custom_call.1} parent=5 // pred_fallthru
        _
      %p169 = scmp.le.s32.totalorder 1, %s16
      %p170 = scmp.lt.s32.totalorder %s16, 3
      %p171 = pnand %p169, %p170
      %p172 = pneg %p171
      // Predicated region
      $region29: #{tpu_custom_call.1} parent=5 // pred_check
        _
      $region30: #{tpu_custom_call.1} parent=5 // pred_check_branch
        %174 = sbr.rel (%p171) target = $region32
      $region31: #{tpu_custom_call.1} parent=5 // pred_region
        %s175 = ssub.s32 %s16, 1
        %s176 = sand.u32 %s29, 1
        %s177 = scalar_lea.sflag [#allocation3], %s176
        %s178 = sand.u32 %s29, 1
        %s179 = smul.addr %s178, 8
        %s180 = scalar_lea.vmem [#allocation2], %s179
        // Predicated region
        $region33: #{tpu_custom_call.1} parent=31 // pred_check
          %p181 = pneg %p42
        $region34: #{tpu_custom_call.1} parent=31 // pred_check_branch
          %183 = sbr.rel (%p181) target = $region36
        $region35: #{tpu_custom_call.1} parent=31 // pred_region
          %184 = dma.done %s177, 128
        $region36: #{tpu_custom_call.1} parent=31 // pred_fallthru
          _
        // Predicated region
        $region37: #{tpu_custom_call.1} parent=31 // pred_check
          %p185 = pneg %p63
        $region38: #{tpu_custom_call.1} parent=31 // pred_check_branch
          %187 = sbr.rel (%p185) target = $region40
        $region39: #{tpu_custom_call.1} parent=31 // pred_region
          %188 = dma.done [#allocation6], 16
        $region40: #{tpu_custom_call.1} parent=31 // pred_fallthru
          _
        // Predicated region
        $region41: #{tpu_custom_call.1} parent=31 // pred_check
          %p189 = pneg %p84
        $region42: #{tpu_custom_call.1} parent=31 // pred_check_branch
          %191 = sbr.rel (%p189) target = $region44
        $region43: #{tpu_custom_call.1} parent=31 // pred_region
          %192 = dma.done [#allocation6], 16
        $region44: #{tpu_custom_call.1} parent=31 // pred_fallthru
          _
        %s193 = sand.u32 %s29, 1
        %s194 = scalar_lea.sflag [#allocation3], %s193
        %s195 = sand.u32 %s29, 1
        %s196 = smul.addr %s195, 8
        %s197 = scalar_lea.vmem [#allocation2], %s196
        %p198 = pneg %p42
        %p199 = pneg %p39
        %p200 = pneg %p63
        %p201 = pneg %p60
        %p202 = pneg %p84
        %p203 = pneg %p81
        %p204 = pneg %p110
        %p205 = pneg %p107
        %s206 = sand.u32 %s97, 1
        %s207 = scalar_lea.sflag [#allocation4], %s206
        %s208 = sand.u32 %s97, 1
        %s209 = smul.addr %s208, 8
        %s210 = scalar_lea.vmem [#allocation8], %s209
        %v211 = vld [vmem:[%s180] sm:$0xff]
        %212 = vadd.xlane.f32.xlu0 %v211
        %v213 = vpop.xlane.xlu0 %212
        %v214 = vmul.f32 %v213, 0.03125
        %v215 = vsub.f32 %v211, %v214
        %v216 = vlaneseq
        %v217 = vand.u32 %v216, 127
        %vm218 = vcmp.lt.s32.totalorder %v217, 32
        %v219 = vsel %vm218, 1, 0
        %vm220 = vcmp.eq.s32.totalorder %v219, 1
        %v221 = vsel %vm220, %v215, 0.0
        %v222 = vmul.f32 %v221, %v221
        %223 = vadd.xlane.f32.xlu0 %v222
        %v224 = vpop.xlane.xlu0 %223
        %v225 = vmul.f32 %v224, 0.03125
        %v226 = vadd.f32 %v225, 1e-05
        %v227 = vrsqrt.pop %v226
        %v228 = vmul.f32 %v221, %v227
        %v229 = vld [vmem:[#allocation5] sm:$0x1]
        %v231 = vlaneseq
        %v232 = vshrl.u32 %v231, 7
        %v233 = vsub.s32 0, %v232
        %v234 = vrot.slane %v229, %v233
        %v236 = vmul.f32 %v228, %v234
        %v237 = vld [vmem:[#allocation7] sm:$0x1]
        %v239 = vlaneseq
        %v240 = vshrl.u32 %v239, 7
        %v241 = vsub.s32 0, %v240
        %v242 = vrot.slane %v237, %v241
        %v244 = vadd.f32 %v236, %v242
        %245 = vst [vmem:[%s210] sm:$0xff] %v244
        %s246 = sand.u32 %s97, 1
        %s247 = scalar_lea.sflag [#allocation4], %s246
        %s248 = sand.u32 %s97, 1
        %s249 = smul.addr %s248, 8
        %s250 = scalar_lea.vmem [#allocation8], %s249
        // Predicated region
        $region45: #{tpu_custom_call.1} parent=31 // pred_check
          %p251 = pneg %p107
        $region46: #{tpu_custom_call.1} parent=31 // pred_check_branch
          %253 = sbr.rel (%p251) target = $region48
        $region47: #{tpu_custom_call.1} parent=31 // pred_region
          %s255 = ssub.s32 128, 128
          %256 = vsyncadd %s247, %s255
          %s257 = smul.addr %s21, 128
          %s258 = scalar_lea.hbm %s3, %s257
          %s260 = sshll.u32 %s250, 4
          %s261 = int_to_ptr.vmem [resolvable:$true] %s260
          %263 = dma.vmem_to_hbm [thread:$0]  %s261, 128, %s258, %s247
        $region48: #{tpu_custom_call.1} parent=31 // pred_fallthru
          _
      $region32: #{tpu_custom_call.1} parent=5 // pred_fallthru
        _
      %p264 = scmp.le.s32.totalorder 2, %s16
      // Predicated region
      $region49: #{tpu_custom_call.1} parent=5 // pred_check
        %p265 = pneg %p264
      $region50: #{tpu_custom_call.1} parent=5 // pred_check_branch
        %267 = sbr.rel (%p265) target = $region52
      $region51: #{tpu_custom_call.1} parent=5 // pred_region
        %s268 = ssub.s32 %s16, 2
        // Predicated region
        $region53: #{tpu_custom_call.1} parent=51 // pred_check
          %p269 = pneg %p113
        $region54: #{tpu_custom_call.1} parent=51 // pred_check_branch
          %271 = sbr.rel (%p269) target = $region56
        $region55: #{tpu_custom_call.1} parent=51 // pred_region
          %s272 = sand.u32 %s98, 1
          %s273 = scalar_lea.sflag [#allocation4], %s272
          %s274 = sand.u32 %s98, 1
          %s275 = smul.addr %s274, 8
          %s276 = scalar_lea.vmem [#allocation8], %s275
          %277 = dma.done %s273, 128
        $region56: #{tpu_custom_call.1} parent=51 // pred_fallthru
          _
      $region52: #{tpu_custom_call.1} parent=5 // pred_fallthru
        _
    $region6: #{tpu_custom_call.1} parent=1 // loop_footer
      %s20 = sadd.s32 1, %s16
    $region7: #{tpu_custom_call.1} parent=1 // loop_footer_branch
      %15 = sbr.rel target = $region3
    $region8: #{tpu_custom_call.1} parent=1 // loop_exit
      _
    %278 = vsyncpa [#allocation3], 1
    %s279 = scalar_lea.sflag [#allocation3], 1
    %280 = vsyncpa %s279, 1
    %281 = vsyncpa [#allocation6], 1
    %282 = vsyncpa [#allocation4], 1
    %s283 = scalar_lea.sflag [#allocation4], 1
    %284 = vsyncpa %s283, 1

</llo_original>
